<compile_context>
chip_gen: v7x
topology: tpu7x:2x2x1
jax: 0.10.0
libtpu: 0.0.40
codegen_flags: <defaults>
</compile_context>

<pallas_src>
import math
import functools

import jax
import jax.numpy as jnp
from jax.experimental import pallas as pl
from jax.experimental.pallas import tpu as pltpu

EMBEDDED_DIM = 16          # self.embedded_dim in the module
LEAKY_SLOPE = 0.01         # torch.nn.LeakyReLU default
_TARGET_TILE = 2048        # target rows per grid step for large batches


def _round_up(n, m):
    return ((n + m - 1) // m) * m


def _cdiv(a, b):
    return -(-a // b)


def _leaky_relu(x):
    return jnp.where(x > 0, x, LEAKY_SLOPE * x)


def _dsp_small_kernel(xt_ref, w16_ref, b16_ref, wab_ref, w21_ref, b128_ref,
                      w22t_ref, b22t_ref, out_ref, *, use_sigmoid, pack_w):
    f32 = jnp.float32

    xt = xt_ref[...]                                      # (TB, pack_w) = [x | t | 0..]

    # Constant slabs (8-aligned static sublane slices).
    w1a0p = w16_ref[0:pack_w, :]                          # (pack_w, 16) rows>=D are 0
    freqsel = w16_ref[pack_w:2 * pack_w, :]               # (pack_w, 16) only row D != 0
    w1b0 = w16_ref[2 * pack_w:2 * pack_w + EMBEDDED_DIM, :]   # (16, 16)
    b16 = b16_ref[...]                                    # (3, 16)
    b1a0, phase16, b1b0 = b16[0:1, :], b16[1:2, :], b16[2:3, :]

    # mlp_1a first layer (t / zero-pad columns hit zero weight rows -> no effect).
    ha = _leaky_relu(jnp.dot(xt, w1a0p, preferred_element_type=f32) + b1a0)   # (TB,16)

    # Sinusoidal timestep embedding without any concat/slice:
    #   xt @ freqsel == t * freq16 ;  cos(a) == sin(a + pi/2) via phase table.
    t_emb = jnp.sin(jnp.dot(xt, freqsel, preferred_element_type=f32) + phase16)  # (TB,16)

    # mlp_1b first layer.
    hb = _leaky_relu(jnp.dot(t_emb, w1b0, preferred_element_type=f32) + b1b0)  # (TB,16)

    # Folded (mlp_1a/1b second linear -> concat -> mlp_2 first linear):
    # two accumulating dots into the 128-wide hidden, no 64-wide concat.
    wa, wb = wab_ref[0:EMBEDDED_DIM, :], wab_ref[EMBEDDED_DIM:2 * EMBEDDED_DIM, :]
    b20f, b21 = b128_ref[0:1, :], b128_ref[1:2, :]
    h = _leaky_relu(jnp.dot(ha, wa, preferred_element_type=f32)
                    + jnp.dot(hb, wb, preferred_element_type=f32) + b20f)      # (TB,128)

    h = _leaky_relu(jnp.dot(h, w21_ref[...], preferred_element_type=f32) + b21)  # (TB,128)

    # Final linear computed transposed -> lane-dense (D, TB) output store.
    # The (TB,128)->(128,TB) transpose runs on the (otherwise idle) XLU.
    y_t = jnp.dot(w22t_ref[...], h.T, preferred_element_type=f32) + b22t_ref[...]  # (D,TB)

    if use_sigmoid:
        y_t = jax.nn.sigmoid(y_t)

    out_ref[...] = y_t.astype(out_ref.dtype)


def init_params(key, input_dim):
    """Deterministic PyTorch-Linear-style init; weights stored (in, out)."""
    dims = [
        ("w1a0", input_dim, 16), ("w1a1", 16, 32),
        ("w1b0", EMBEDDED_DIM, 16), ("w1b1", 16, 32),
        ("w20", 64, 128), ("w21", 128, 128), ("w22", 128, input_dim),
    ]
    params = {}
    for name, fan_in, fan_out in dims:
        key, kw, kb = jax.random.split(key, 3)
        bound = 1.0 / math.sqrt(fan_in)
        params[name] = jax.random.uniform(
            kw, (fan_in, fan_out), jnp.float32, -bound, bound)
        params[name.replace("w", "b", 1)] = jax.random.uniform(
            kb, (1, fan_out), jnp.float32, -bound, bound)
    return params


def _pack_constants(params, input_dim, pack_w):
    """Host-side weight folding + consolidation into 7 constant slabs."""
    D = input_dim
    half = EMBEDDED_DIM // 2
    scale = math.log(10000.0) / (half - 1)
    freq = jnp.exp(jnp.arange(half, dtype=jnp.float32) * -scale)
    freq16 = jnp.concatenate([freq, freq])                                   # (16,)
    phase16 = jnp.concatenate(
        [jnp.zeros((half,), jnp.float32),
         jnp.full((half,), math.pi / 2, jnp.float32)])[None, :]              # (1,16)

    # Zero-padded first-layer weight + frequency-selector so the packed (B,pack_w)
    # input needs no slicing inside the kernel.
    w1a0p = jnp.zeros((pack_w, 16), jnp.float32).at[:D].set(params["w1a0"])
    freqsel = jnp.zeros((pack_w, 16), jnp.float32).at[D].set(freq16)

    w16 = jnp.concatenate([w1a0p, freqsel, params["w1b0"]], axis=0)          # (2*pack_w+16, 16)
    b16 = jnp.concatenate([params["b1a0"], phase16, params["b1b0"]], axis=0)  # (3, 16)

    # Fold the linear (no-nonlinearity) chain w1a1/w1b1 -> w20.
    w20 = params["w20"]                                                       # (64, 128)
    w20x, w20t = w20[:32], w20[32:]
    wa = params["w1a1"] @ w20x                                                # (16, 128)
    wb = params["w1b1"] @ w20t                                                # (16, 128)
    b20f = params["b20"] + params["b1a1"] @ w20x + params["b1b1"] @ w20t      # (1, 128)

    wab = jnp.concatenate([wa, wb], axis=0)                                   # (32, 128)
    b128 = jnp.concatenate([b20f, params["b21"]], axis=0)                     # (2, 128)

    w22t = params["w22"].T                                                    # (D, 128)
    b22t = params["b22"].T                                                    # (D, 1)
    return (w16, b16, wab, params["w21"], b128, w22t, b22t)


def _choose_tile(B, tile_b):
    """Pick a batch tile; multi-tile case must be 128-aligned (lane-dense store)."""
    if tile_b is None:
        if B <= _TARGET_TILE:
            return _round_up(max(B, 8), 8)                      # single tile
        n_tiles = _cdiv(B, _TARGET_TILE)                        # bound padding waste
        return _round_up(_cdiv(B, n_tiles), 128)
    tile_b = _round_up(max(tile_b, 8), 8)
    if _round_up(B, tile_b) > tile_b:                           # more than one tile
        tile_b = _round_up(tile_b, 128)
    return tile_b


def dsp_small_forward(x, t, params, *, sigmoid=False, tile_b=None):
    """Pallas implementation of DSPSmall.forward.

    x: (B, input_dim) float32, t: (B,) or (B, 1) float32.
    Returns (B, input_dim) float32.
    """
    if x.ndim == 1:
        x = x[None, :]
    if t.ndim == 1:
        t = t[:, None]
    x = x.astype(jnp.float32)
    t = t.astype(jnp.float32)

    B, input_dim = x.shape

    # Pack x and t into a single streaming operand (one DMA per grid step).
    pack_w = _round_up(input_dim + 1, 8)
    xt = (jnp.zeros((B, pack_w), jnp.float32)
          .at[:, :input_dim].set(x)
          .at[:, input_dim].set(t[:, 0]))

    consts = _pack_constants(params, input_dim, pack_w)

    tile_b = _choose_tile(B, tile_b)
    b_pad = _round_up(B, tile_b)
    if b_pad != B:
        xt = jnp.pad(xt, ((0, b_pad - B), (0, 0)))
    grid = (b_pad // tile_b,)

    in_specs = [pl.BlockSpec((tile_b, pack_w), lambda i: (i, 0))] + [
        # Constant slabs: constant index map -> stay VMEM-resident across steps.
        pl.BlockSpec(c.shape, lambda i: (0, 0)) for c in consts
    ]
    # Transposed, lane-dense output: (input_dim, b_pad) tiled along lanes.
    out_specs = pl.BlockSpec((input_dim, tile_b), lambda i: (0, i))

    kernel = functools.partial(
        _dsp_small_kernel, use_sigmoid=sigmoid, pack_w=pack_w)

    y_t = pl.pallas_call(
        kernel,
        out_shape=jax.ShapeDtypeStruct((input_dim, b_pad), jnp.float32),
        grid=grid,
        in_specs=in_specs,
        out_specs=out_specs,
        compiler_params=pltpu.CompilerParams(
            dimension_semantics=("parallel",),        # shard batch across TCs on v7x
            vmem_limit_bytes=32 * 1024 * 1024,        # safe on v7x's 64 MiB VMEM
        ),
    )(xt, *consts)

    # Trivial XLA transpose back to (B, input_dim).
    return y_t.T[:B]


def _reference_forward(x, t, params, *, sigmoid=False):
    """Pure-JAX reference replicating the PyTorch forward (in f32, unfolded)."""
    if x.ndim == 1:
        x = x[None, :]
    if t.ndim == 1:
        t = t[:, None]
    half_dim = EMBEDDED_DIM // 2
    scale = math.log(10000.0) / (half_dim - 1)
    freq = jnp.exp(jnp.arange(half_dim, dtype=jnp.float32) * -scale)[None, :]
    arg = t * freq
    t_emb = jnp.concatenate([jnp.sin(arg), jnp.cos(arg)], axis=-1)

    def leaky(v):
        return jnp.where(v > 0, v, LEAKY_SLOPE * v)

    t2 = leaky(t_emb @ params["w1b0"] + params["b1b0"]) @ params["w1b1"] + params["b1b1"]
    x1 = leaky(x @ params["w1a0"] + params["b1a0"]) @ params["w1a1"] + params["b1a1"]
    xt = jnp.concatenate([x1, t2], axis=-1)
    h = leaky(xt @ params["w20"] + params["b20"])
    h = leaky(h @ params["w21"] + params["b21"])
    y = h @ params["w22"] + params["b22"]
    if sigmoid:
        y = jax.nn.sigmoid(y)
    return y


if __name__ == "__main__":
    INPUT_DIM = 4

    key = jax.random.PRNGKey(0)
    k_params, k_x, k_t = jax.random.split(key, 3)
    params = init_params(k_params, INPUT_DIM)

    # Case 1: small batch, single tile.
    B = 8
    x = jax.random.normal(k_x, (B, INPUT_DIM), jnp.float32)
    t = jax.random.uniform(k_t, (B,), jnp.float32)       # 1-D, forward unsqueezes
    y = jax.block_until_ready(dsp_small_forward(x, t, params, sigmoid=False))
    y_ref = _reference_forward(x, t, params, sigmoid=False)
    assert y.shape == (B, INPUT_DIM)
    assert jnp.allclose(y, y_ref, atol=1e-4, rtol=1e-4), "mismatch vs JAX reference"

    # Case 2: exercises the multi-tile batch grid (3 tiles, 128-row tiles),
    # the padding path and the sigmoid head.
    B2 = 300
    x2 = jax.random.normal(jax.random.PRNGKey(1), (B2, INPUT_DIM), jnp.float32)
    t2 = jax.random.uniform(jax.random.PRNGKey(2), (B2,), jnp.float32)
    y2 = jax.block_until_ready(
        dsp_small_forward(x2, t2, params, sigmoid=True, tile_b=128))
    y2_ref = _reference_forward(x2, t2, params, sigmoid=True)
    assert y2.shape == (B2, INPUT_DIM)
    assert jnp.allclose(y2, y2_ref, atol=1e-4, rtol=1e-4), "mismatch (gridded/sigmoid)"

    # Case 3: batch not a multiple of 8 -> single tile padded to 16.
    B3 = 13
    x3 = jax.random.normal(jax.random.PRNGKey(3), (B3, INPUT_DIM), jnp.float32)
    t3 = jax.random.uniform(jax.random.PRNGKey(4), (B3,), jnp.float32)
    y3 = jax.block_until_ready(dsp_small_forward(x3, t3, params, sigmoid=False))
    y3_ref = _reference_forward(x3, t3, params, sigmoid=False)
    assert y3.shape == (B3, INPUT_DIM)
    assert jnp.allclose(y3, y3_ref, atol=1e-4, rtol=1e-4), "mismatch (padded batch)"

    print("KERNEL_OK")
</pallas_src>

<mosaic_0001>
module attributes {stable_mosaic.version = 11 : i64} {
  func.func @_dsp_small_kernel(%arg0: i32, %arg1: memref<8x8xf32, #tpu.memory_space<vmem>>, %arg2: memref<32x16xf32, #tpu.memory_space<vmem>>, %arg3: memref<3x16xf32, #tpu.memory_space<vmem>>, %arg4: memref<32x128xf32, #tpu.memory_space<vmem>>, %arg5: memref<128x128xf32, #tpu.memory_space<vmem>>, %arg6: memref<2x128xf32, #tpu.memory_space<vmem>>, %arg7: memref<4x128xf32, #tpu.memory_space<vmem>>, %arg8: memref<4x1xf32, #tpu.memory_space<vmem>>, %arg9: memref<4x8xf32, #tpu.memory_space<vmem>>) attributes {dimension_semantics = [#tpu.dimension_semantics<parallel>], iteration_bounds = array<i64: 1>, scalar_prefetch = 0 : i64, scratch_operands = 0 : i64, tpu.core_type = #tpu.core_type<tc>, window_params = [{transform_indices = @transform_0, window_bounds = array<i64: 8, 8>}, {pipeline_mode = #tpu.pipeline_mode<synchronous>, transform_indices = @transform_1, window_bounds = array<i64: 32, 16>}, {pipeline_mode = #tpu.pipeline_mode<synchronous>, transform_indices = @transform_2, window_bounds = array<i64: 3, 16>}, {pipeline_mode = #tpu.pipeline_mode<synchronous>, transform_indices = @transform_3, window_bounds = array<i64: 32, 128>}, {pipeline_mode = #tpu.pipeline_mode<synchronous>, transform_indices = @transform_4, window_bounds = array<i64: 128, 128>}, {pipeline_mode = #tpu.pipeline_mode<synchronous>, transform_indices = @transform_5, window_bounds = array<i64: 2, 128>}, {pipeline_mode = #tpu.pipeline_mode<synchronous>, transform_indices = @transform_6, window_bounds = array<i64: 4, 128>}, {pipeline_mode = #tpu.pipeline_mode<synchronous>, transform_indices = @transform_7, window_bounds = array<i64: 4, 1>}, {transform_indices = @transform_8, window_bounds = array<i64: 4, 8>}]} {
    %c0 = arith.constant 0 : index
    %c0_0 = arith.constant 0 : index
    %0 = vector.load %arg1[%c0, %c0_0] : memref<8x8xf32, #tpu.memory_space<vmem>>, vector<8x8xf32>
    %c0_1 = arith.constant 0 : index
    %c0_2 = arith.constant 0 : index
    %1 = vector.load %arg2[%c0_1, %c0_2] : memref<32x16xf32, #tpu.memory_space<vmem>>, vector<8x16xf32>
    %c8 = arith.constant 8 : index
    %c0_3 = arith.constant 0 : index
    %2 = vector.load %arg2[%c8, %c0_3] : memref<32x16xf32, #tpu.memory_space<vmem>>, vector<8x16xf32>
    %c16 = arith.constant 16 : index
    %c0_4 = arith.constant 0 : index
    %3 = vector.load %arg2[%c16, %c0_4] : memref<32x16xf32, #tpu.memory_space<vmem>>, vector<16x16xf32>
    %c0_5 = arith.constant 0 : index
    %c0_6 = arith.constant 0 : index
    %4 = vector.load %arg3[%c0_5, %c0_6] : memref<3x16xf32, #tpu.memory_space<vmem>>, vector<3x16xf32>
    %5 = vector.extract_strided_slice %4 {offsets = [0, 0], sizes = [1, 16], strides = [1, 1]} : vector<3x16xf32> to vector<1x16xf32>
    %6 = vector.extract_strided_slice %4 {offsets = [1, 0], sizes = [1, 16], strides = [1, 1]} : vector<3x16xf32> to vector<1x16xf32>
    %7 = vector.extract_strided_slice %4 {offsets = [2, 0], sizes = [1, 16], strides = [1, 1]} : vector<3x16xf32> to vector<1x16xf32>
    %cst = arith.constant dense<0.000000e+00> : vector<8x16xf32>
    %8 = tpu.matmul %0, %1, %cst {dimension_numbers = #tpu.dot_dimension_numbers<[1], [0], [0], [1], [0, 0, 1, 1], [], []>} : vector<8x8xf32>, vector<8x16xf32>, vector<8x16xf32> -> vector<8x16xf32>
    %9 = vector.broadcast %5 : vector<1x16xf32> to vector<8x16xf32>
    %10 = arith.addf %8, %9 : vector<8x16xf32>
    %cst_7 = arith.constant 0.000000e+00 : f32
    %11 = vector.broadcast %cst_7 : f32 to vector<8x16xf32>
    %12 = arith.cmpf ogt, %10, %11 : vector<8x16xf32>
    %cst_8 = arith.constant 0.00999999977 : f32
    %13 = vector.broadcast %cst_8 : f32 to vector<8x16xf32>
    %14 = arith.mulf %13, %10 : vector<8x16xf32>
    %15 = arith.select %12, %10, %14 : vector<8x16xi1>, vector<8x16xf32>
    %cst_9 = arith.constant dense<0.000000e+00> : vector<8x16xf32>
    %16 = tpu.matmul %0, %2, %cst_9 {dimension_numbers = #tpu.dot_dimension_numbers<[1], [0], [0], [1], [0, 0, 1, 1], [], []>} : vector<8x8xf32>, vector<8x16xf32>, vector<8x16xf32> -> vector<8x16xf32>
    %17 = vector.broadcast %6 : vector<1x16xf32> to vector<8x16xf32>
    %18 = arith.addf %16, %17 : vector<8x16xf32>
    %19 = math.sin %18 : vector<8x16xf32>
    %cst_10 = arith.constant dense<0.000000e+00> : vector<8x16xf32>
    %20 = tpu.matmul %19, %3, %cst_10 {dimension_numbers = #tpu.dot_dimension_numbers<[1], [0], [0], [1], [0, 0, 1, 1], [], []>} : vector<8x16xf32>, vector<16x16xf32>, vector<8x16xf32> -> vector<8x16xf32>
    %21 = vector.broadcast %7 : vector<1x16xf32> to vector<8x16xf32>
    %22 = arith.addf %20, %21 : vector<8x16xf32>
    %cst_11 = arith.constant 0.000000e+00 : f32
    %23 = vector.broadcast %cst_11 : f32 to vector<8x16xf32>
    %24 = arith.cmpf ogt, %22, %23 : vector<8x16xf32>
    %cst_12 = arith.constant 0.00999999977 : f32
    %25 = vector.broadcast %cst_12 : f32 to vector<8x16xf32>
    %26 = arith.mulf %25, %22 : vector<8x16xf32>
    %27 = arith.select %24, %22, %26 : vector<8x16xi1>, vector<8x16xf32>
    %c0_13 = arith.constant 0 : index
    %c0_14 = arith.constant 0 : index
    %28 = vector.load %arg4[%c0_13, %c0_14] : memref<32x128xf32, #tpu.memory_space<vmem>>, vector<16x128xf32>
    %c16_15 = arith.constant 16 : index
    %c0_16 = arith.constant 0 : index
    %29 = vector.load %arg4[%c16_15, %c0_16] : memref<32x128xf32, #tpu.memory_space<vmem>>, vector<16x128xf32>
    %c0_17 = arith.constant 0 : index
    %c0_18 = arith.constant 0 : index
    %30 = vector.load %arg6[%c0_17, %c0_18] : memref<2x128xf32, #tpu.memory_space<vmem>>, vector<1x128xf32>
    %c1 = arith.constant 1 : index
    %c0_19 = arith.constant 0 : index
    %31 = vector.load %arg6[%c1, %c0_19] : memref<2x128xf32, #tpu.memory_space<vmem>>, vector<1x128xf32>
    %cst_20 = arith.constant dense<0.000000e+00> : vector<8x128xf32>
    %32 = tpu.matmul %15, %28, %cst_20 {dimension_numbers = #tpu.dot_dimension_numbers<[1], [0], [0], [1], [0, 0, 1, 1], [], []>} : vector<8x16xf32>, vector<16x128xf32>, vector<8x128xf32> -> vector<8x128xf32>
    %cst_21 = arith.constant dense<0.000000e+00> : vector<8x128xf32>
    %33 = tpu.matmul %27, %29, %cst_21 {dimension_numbers = #tpu.dot_dimension_numbers<[1], [0], [0], [1], [0, 0, 1, 1], [], []>} : vector<8x16xf32>, vector<16x128xf32>, vector<8x128xf32> -> vector<8x128xf32>
    %34 = arith.addf %32, %33 : vector<8x128xf32>
    %35 = vector.broadcast %30 : vector<1x128xf32> to vector<8x128xf32>
    %36 = arith.addf %34, %35 : vector<8x128xf32>
    %cst_22 = arith.constant 0.000000e+00 : f32
    %37 = vector.broadcast %cst_22 : f32 to vector<8x128xf32>
    %38 = arith.cmpf ogt, %36, %37 : vector<8x128xf32>
    %cst_23 = arith.constant 0.00999999977 : f32
    %39 = vector.broadcast %cst_23 : f32 to vector<8x128xf32>
    %40 = arith.mulf %39, %36 : vector<8x128xf32>
    %41 = arith.select %38, %36, %40 : vector<8x128xi1>, vector<8x128xf32>
    %c0_24 = arith.constant 0 : index
    %c0_25 = arith.constant 0 : index
    %42 = vector.load %arg5[%c0_24, %c0_25] : memref<128x128xf32, #tpu.memory_space<vmem>>, vector<128x128xf32>
    %cst_26 = arith.constant dense<0.000000e+00> : vector<8x128xf32>
    %43 = tpu.matmul %41, %42, %cst_26 {dimension_numbers = #tpu.dot_dimension_numbers<[1], [0], [0], [1], [0, 0, 1, 1], [], []>} : vector<8x128xf32>, vector<128x128xf32>, vector<8x128xf32> -> vector<8x128xf32>
    %44 = vector.broadcast %31 : vector<1x128xf32> to vector<8x128xf32>
    %45 = arith.addf %43, %44 : vector<8x128xf32>
    %cst_27 = arith.constant 0.000000e+00 : f32
    %46 = vector.broadcast %cst_27 : f32 to vector<8x128xf32>
    %47 = arith.cmpf ogt, %45, %46 : vector<8x128xf32>
    %cst_28 = arith.constant 0.00999999977 : f32
    %48 = vector.broadcast %cst_28 : f32 to vector<8x128xf32>
    %49 = arith.mulf %48, %45 : vector<8x128xf32>
    %50 = arith.select %47, %45, %49 : vector<8x128xi1>, vector<8x128xf32>
    %c0_29 = arith.constant 0 : index
    %c0_30 = arith.constant 0 : index
    %51 = vector.load %arg7[%c0_29, %c0_30] : memref<4x128xf32, #tpu.memory_space<vmem>>, vector<4x128xf32>
    %52 = tpu.transpose %50, [1, 0] : vector<8x128xf32> -> vector<128x8xf32>
    %cst_31 = arith.constant dense<0.000000e+00> : vector<4x8xf32>
    %53 = tpu.matmul %51, %52, %cst_31 {dimension_numbers = #tpu.dot_dimension_numbers<[1], [0], [0], [1], [0, 0, 1, 1], [], []>} : vector<4x128xf32>, vector<128x8xf32>, vector<4x8xf32> -> vector<4x8xf32>
    %c0_32 = arith.constant 0 : index
    %c0_33 = arith.constant 0 : index
    %54 = vector.load %arg8[%c0_32, %c0_33] : memref<4x1xf32, #tpu.memory_space<vmem>>, vector<4x1xf32>
    %55 = vector.broadcast %54 : vector<4x1xf32> to vector<4x8xf32>
    %56 = arith.addf %53, %55 : vector<4x8xf32>
    %c0_34 = arith.constant 0 : index
    %c0_35 = arith.constant 0 : index
    %57 = vector.load %arg9[%c0_34, %c0_35] : memref<4x8xf32, #tpu.memory_space<vmem>>, vector<4x8xf32>
    tpu.vector_store %arg9[%c0_34, %c0_35], %56 {strides = array<i32>} : memref<4x8xf32, #tpu.memory_space<vmem>>, vector<4x8xf32>,
    return
  }
  func.func @transform_0(%arg0: i32) -> (i32, i32) {
    %c0_i32 = arith.constant 0 : i32
    %c0_i32_0 = arith.constant 0 : i32
    return %arg0, %c0_i32 : i32, i32
  }
  func.func @transform_1(%arg0: i32) -> (i32, i32) {
    %c0_i32 = arith.constant 0 : i32
    %c0_i32_0 = arith.constant 0 : i32
    %c0_i32_1 = arith.constant 0 : i32
    return %c0_i32, %c0_i32_0 : i32, i32
  }
  func.func @transform_2(%arg0: i32) -> (i32, i32) {
    %c0_i32 = arith.constant 0 : i32
    %c0_i32_0 = arith.constant 0 : i32
    %c0_i32_1 = arith.constant 0 : i32
    return %c0_i32, %c0_i32_0 : i32, i32
  }
  func.func @transform_3(%arg0: i32) -> (i32, i32) {
    %c0_i32 = arith.constant 0 : i32
    %c0_i32_0 = arith.constant 0 : i32
    %c0_i32_1 = arith.constant 0 : i32
    return %c0_i32, %c0_i32_0 : i32, i32
  }
  func.func @transform_4(%arg0: i32) -> (i32, i32) {
    %c0_i32 = arith.constant 0 : i32
    %c0_i32_0 = arith.constant 0 : i32
    %c0_i32_1 = arith.constant 0 : i32
    return %c0_i32, %c0_i32_0 : i32, i32
  }
  func.func @transform_5(%arg0: i32) -> (i32, i32) {
    %c0_i32 = arith.constant 0 : i32
    %c0_i32_0 = arith.constant 0 : i32
    %c0_i32_1 = arith.constant 0 : i32
    return %c0_i32, %c0_i32_0 : i32, i32
  }
  func.func @transform_6(%arg0: i32) -> (i32, i32) {
    %c0_i32 = arith.constant 0 : i32
    %c0_i32_0 = arith.constant 0 : i32
    %c0_i32_1 = arith.constant 0 : i32
    return %c0_i32, %c0_i32_0 : i32, i32
  }
  func.func @transform_7(%arg0: i32) -> (i32, i32) {
    %c0_i32 = arith.constant 0 : i32
    %c0_i32_0 = arith.constant 0 : i32
    %c0_i32_1 = arith.constant 0 : i32
    return %c0_i32, %c0_i32_0 : i32, i32
  }
  func.func @transform_8(%arg0: i32) -> (i32, i32) {
    %c0_i32 = arith.constant 0 : i32
    %c0_i32_0 = arith.constant 0 : i32
    return %c0_i32, %arg0 : i32, i32
  }
}

</mosaic_0001>

<llo_original>
// kernel: tpu_custom_call.1
$region0: #{tpu_custom_call.1}
  #allocation0 [shape = 'u32[]', space=smem, size = 0x4, offset = 0x4, fixed_abs, tag = 'smem constant byte address 0x4 - core index']
  #allocation1 [shape = 'u32[144,128]{1,0:T(1,128)}', space=vmem, size = 0x12000, scoped, tag = 'internal scratch']
  %s0 = inlined_call_operand.vmem [shape: f32[8,8], index: 0, kind: input, shape index: {}]
  %s1 = inlined_call_operand.vmem [shape: f32[32,16], index: 1, kind: input, shape index: {}]
  %s2 = inlined_call_operand.vmem [shape: f32[3,16], index: 2, kind: input, shape index: {}]
  %s3 = inlined_call_operand.vmem [shape: f32[32,128], index: 3, kind: input, shape index: {}]
  %s4 = inlined_call_operand.hbm [shape: f32[128,128], index: 4, kind: input, shape index: {}]
  %s5 = inlined_call_operand.vmem [shape: f32[2,128], index: 5, kind: input, shape index: {}]
  %s6 = inlined_call_operand.vmem [shape: f32[4,128], index: 6, kind: input, shape index: {}]
  %s7 = inlined_call_operand.vmem [shape: f32[4,1], index: 7, kind: input, shape index: {}]
  %s8 = inlined_call_operand.hbm [shape: f32[4,8], index: 8, kind: output, shape index: {}]
  %s9 = sld [smem:[#allocation0]]
  $region46: #{tpu_custom_call.1} parent=0
    _
  %s11 = ssub.s32 1, %s9
  %s12 = scalar_select 0, %s11, %s9
  $region1: #{tpu_custom_call.1} parent=0
    #allocation2 [shape = 'u8[65536]{0}', space=vmem, size = 0x10000, scoped, tag = 'input window, operand 4, single buffered']
    #allocation3 [shape = 's32[1]{0}', space=sflag, size = 0x4, scoped, tag = 'scoped memory for tpu_custom_call.1']
    #allocation4 [shape = 's32[1]{0}', space=sflag, size = 0x4, scoped, tag = 'scoped memory for tpu_custom_call.1']
    #allocation5 [shape = 'u8[2048]{0}', space=vmem, size = 0x800, scoped, tag = 'output window, operand 0, single buffered']
    %13 = vsyncpa [#allocation3], 0
    %14 = vsyncpa [#allocation4], 0
    // Predicated region
    $region2: #{tpu_custom_call.1} parent=1 // pred_check
      _
    $region3: #{tpu_custom_call.1} parent=1 // pred_check_branch
      %16 = sbr.rel (0) target = $region5
    $region4: #{tpu_custom_call.1} parent=1 // pred_region
      _
    $region5: #{tpu_custom_call.1} parent=1 // pred_fallthru
      _
    // Predicated region
    $region6: #{tpu_custom_call.1} parent=1 // pred_check
      _
    $region7: #{tpu_custom_call.1} parent=1 // pred_check_branch
      %18 = sbr.rel (0) target = $region9
    $region8: #{tpu_custom_call.1} parent=1 // pred_region
      _
    $region9: #{tpu_custom_call.1} parent=1 // pred_fallthru
      _
    // Predicated region
    $region10: #{tpu_custom_call.1} parent=1 // pred_check
      _
    $region11: #{tpu_custom_call.1} parent=1 // pred_check_branch
      %20 = sbr.rel (0) target = $region13
    $region12: #{tpu_custom_call.1} parent=1 // pred_region
      _
    $region13: #{tpu_custom_call.1} parent=1 // pred_fallthru
      _
    // Predicated region
    $region14: #{tpu_custom_call.1} parent=1 // pred_check
      _
    $region15: #{tpu_custom_call.1} parent=1 // pred_check_branch
      %22 = sbr.rel (0) target = $region17
    $region16: #{tpu_custom_call.1} parent=1 // pred_region
      _
    $region17: #{tpu_custom_call.1} parent=1 // pred_fallthru
      _
    // Predicated region
    $region18: #{tpu_custom_call.1} parent=1 // pred_check
      _
    $region19: #{tpu_custom_call.1} parent=1 // pred_check_branch
      %24 = sbr.rel (0) target = $region21
    $region20: #{tpu_custom_call.1} parent=1 // pred_region
      %s26 = ssub.s32 2048, 2048
      %27 = vsyncadd [#allocation3], %s26
      %s28 = sshll.u32 [#allocation2], 4
      %s29 = int_to_ptr.vmem [resolvable:$true] %s28
      %34 = dma.hbm_to_vmem [thread:$0]  %s4, 2048, %s29, [#allocation3], 128, 128, 8
    $region21: #{tpu_custom_call.1} parent=1 // pred_fallthru
      _
    // Predicated region
    $region22: #{tpu_custom_call.1} parent=1 // pred_check
      _
    $region23: #{tpu_custom_call.1} parent=1 // pred_check_branch
      %36 = sbr.rel (0) target = $region25
    $region24: #{tpu_custom_call.1} parent=1 // pred_region
      _
    $region25: #{tpu_custom_call.1} parent=1 // pred_fallthru
      _
    // Predicated region
    $region26: #{tpu_custom_call.1} parent=1 // pred_check
      _
    $region27: #{tpu_custom_call.1} parent=1 // pred_check_branch
      %38 = sbr.rel (0) target = $region29
    $region28: #{tpu_custom_call.1} parent=1 // pred_region
      _
    $region29: #{tpu_custom_call.1} parent=1 // pred_fallthru
      _
    // Predicated region
    $region30: #{tpu_custom_call.1} parent=1 // pred_check
      _
    $region31: #{tpu_custom_call.1} parent=1 // pred_check_branch
      %40 = sbr.rel (0) target = $region33
    $region32: #{tpu_custom_call.1} parent=1 // pred_region
      _
    $region33: #{tpu_custom_call.1} parent=1 // pred_fallthru
      _
    // Predicated region
    $region34: #{tpu_custom_call.1} parent=1 // pred_check
      _
    $region35: #{tpu_custom_call.1} parent=1 // pred_check_branch
      %42 = sbr.rel (0) target = $region37
    $region36: #{tpu_custom_call.1} parent=1 // pred_region
      %43 = dma.done [#allocation3], 2048
    $region37: #{tpu_custom_call.1} parent=1 // pred_fallthru
      _
    %v44 = vld [vmem:[%s0] sm:$0xff]
    %v45 = vld [vmem:[%s1] sm:$0xff]
    %v46 = vld [vmem:[%s1 + $0x8] sm:$0xff]
    %v47 = vld [vmem:[%s1 + $0x10] sm:$0xff]
    %v48 = vld [vmem:[%s1 + $0x18] sm:$0xff]
    %v49 = vld [vmem:[%s2] sm:$0x7]
    %v50 = vlaneseq
    %v51 = vshrl.u32 %v50, 7
    %v52 = vsub.s32 0, %v51
    %v53 = vrot.slane %v49, %v52
    %vm54 = vcmask 64512
    %v56 = vsel %vm54, %v44, 0
    %58 = vmatprep.subr.mxu0 0.0
    %59 = vmatpush1.msra.mxu0 %v45
    %60 = vmatprep.subr.mxu0 0.0
    %61 = vmatpush1.msra.mxu0 0.0
    %62 = vmatprep.subr.mxu0 0.0
    %63 = vmatpush1.msra.mxu0 0.0
    %64 = vmatprep.subr.mxu0 0.0
    %65 = vmatpush1.msra.mxu0 0.0
    %66 = vmatprep.subr.mxu0 0.0
    %67 = vmatpush1.msra.mxu0 0.0
    %68 = vmatprep.subr.mxu0 0.0
    %69 = vmatpush1.msra.mxu0 0.0
    %70 = vmatprep.subr.mxu0 0.0
    %71 = vmatpush1.msra.mxu0 0.0
    %72 = vmatprep.subr.mxu0 0.0
    %73 = vmatpush1.msra.mxu0 0.0
    %74 = vmatprep.subr.mxu0 0.0
    %75 = vmatpush1.msra.mxu0 0.0
    %76 = vmatprep.subr.mxu0 0.0
    %77 = vmatpush1.msra.mxu0 0.0
    %78 = vmatprep.subr.mxu0 0.0
    %79 = vmatpush1.msra.mxu0 0.0
    %80 = vmatprep.subr.mxu0 0.0
    %81 = vmatpush1.msra.mxu0 0.0
    %82 = vmatprep.subr.mxu0 0.0
    %83 = vmatpush1.msra.mxu0 0.0
    %84 = vmatprep.subr.mxu0 0.0
    %85 = vmatpush1.msra.mxu0 0.0
    %86 = vmatprep.subr.mxu0 0.0
    %87 = vmatpush1.msra.mxu0 0.0
    %88 = vmatprep.subr.mxu0 0.0
    %89 = vmatpush1.msra.mxu0 0.0
    %90 = vmatprep.subr.mxu0 0.0
    %91 = vmatpush1.msra.mxu0 0.0
    %92 = vmatprep.subr.mxu0 0.0
    %93 = vmatpush1.msra.mxu0 0.0
    %94 = vmatprep.subr.mxu0 0.0
    %95 = vmatpush1.msra.mxu0 0.0
    %96 = vmatprep.subr.mxu0 0.0
    %97 = vmatpush1.msra.mxu0 0.0
    %98 = vmatprep.subr.mxu0 0.0
    %99 = vmatpush1.msra.mxu0 0.0
    %100 = vmatprep.subr.mxu0 0.0
    %101 = vmatpush1.msra.mxu0 0.0
    %102 = vmatprep.subr.mxu0 0.0
    %103 = vmatpush1.msra.mxu0 0.0
    %104 = vmatprep.subr.mxu0 0.0
    %105 = vmatpush1.msra.mxu0 0.0
    %106 = vmatprep.subr.mxu0 0.0
    %107 = vmatpush1.msra.mxu0 0.0
    %108 = vmatprep.subr.mxu0 0.0
    %109 = vmatpush1.msra.mxu0 0.0
    %110 = vmatprep.subr.mxu0 0.0
    %111 = vmatpush1.msra.mxu0 0.0
    %112 = vmatprep.subr.mxu0 0.0
    %113 = vmatpush1.msra.mxu0 0.0
    %114 = vmatprep.subr.mxu0 0.0
    %115 = vmatpush1.msra.mxu0 0.0
    %116 = vmatprep.subr.mxu0 0.0
    %117 = vmatpush1.msra.mxu0 0.0
    %118 = vmatprep.subr.mxu0 0.0
    %119 = vmatpush1.msra.mxu0 0.0
    %120 = vmatprep.subr.mxu0 0.0
    %121 = vmatpush1.msra.mxu0 0.0
    %122 = vmatprep.mubr.f32.mxu0 0.0
    %123 = vmatmul.mubr.f32.gmra.mrb[0].mxu0 %v56
    %v124 = vpop.f32.mrb[0].mxu0
    %v125 = vadd.f32 %v53, %v124
    %v126 = vpop.f32.mrb[0].mxu0
    %127 = vdwg.mxu0
    %vm128 = vcmp.gt.f32.partialorder %v125, 0.0
    %v129 = vmul.f32 %v125, 0.01
    %v130 = vsel %vm128, %v125, %v129
    %v131 = vlaneseq
    %v132 = vshrl.u32 %v131, 7
    %v133 = vsub.s32 1, %v132
    %v134 = vrot.slane %v49, %v133
    %135 = vmatprep.subr.mxu0 0.0
    %136 = vmatpush1.msra.mxu0 %v46
    %137 = vmatprep.subr.mxu0 0.0
    %138 = vmatpush1.msra.mxu0 0.0
    %139 = vmatprep.subr.mxu0 0.0
    %140 = vmatpush1.msra.mxu0 0.0
    %141 = vmatprep.subr.mxu0 0.0
    %142 = vmatpush1.msra.mxu0 0.0
    %143 = vmatprep.subr.mxu0 0.0
    %144 = vmatpush1.msra.mxu0 0.0
    %145 = vmatprep.subr.mxu0 0.0
    %146 = vmatpush1.msra.mxu0 0.0
    %147 = vmatprep.subr.mxu0 0.0
    %148 = vmatpush1.msra.mxu0 0.0
    %149 = vmatprep.subr.mxu0 0.0
    %150 = vmatpush1.msra.mxu0 0.0
    %151 = vmatprep.subr.mxu0 0.0
    %152 = vmatpush1.msra.mxu0 0.0
    %153 = vmatprep.subr.mxu0 0.0
    %154 = vmatpush1.msra.mxu0 0.0
    %155 = vmatprep.subr.mxu0 0.0
    %156 = vmatpush1.msra.mxu0 0.0
    %157 = vmatprep.subr.mxu0 0.0
    %158 = vmatpush1.msra.mxu0 0.0
    %159 = vmatprep.subr.mxu0 0.0
    %160 = vmatpush1.msra.mxu0 0.0
    %161 = vmatprep.subr.mxu0 0.0
    %162 = vmatpush1.msra.mxu0 0.0
    %163 = vmatprep.subr.mxu0 0.0
    %164 = vmatpush1.msra.mxu0 0.0
    %165 = vmatprep.subr.mxu0 0.0
    %166 = vmatpush1.msra.mxu0 0.0
    %167 = vmatprep.subr.mxu0 0.0
    %168 = vmatpush1.msra.mxu0 0.0
    %169 = vmatprep.subr.mxu0 0.0
    %170 = vmatpush1.msra.mxu0 0.0
    %171 = vmatprep.subr.mxu0 0.0
    %172 = vmatpush1.msra.mxu0 0.0
    %173 = vmatprep.subr.mxu0 0.0
    %174 = vmatpush1.msra.mxu0 0.0
    %175 = vmatprep.subr.mxu0 0.0
    %176 = vmatpush1.msra.mxu0 0.0
    %177 = vmatprep.subr.mxu0 0.0
    %178 = vmatpush1.msra.mxu0 0.0
    %179 = vmatprep.subr.mxu0 0.0
    %180 = vmatpush1.msra.mxu0 0.0
    %181 = vmatprep.subr.mxu0 0.0
    %182 = vmatpush1.msra.mxu0 0.0
    %183 = vmatprep.subr.mxu0 0.0
    %184 = vmatpush1.msra.mxu0 0.0
    %185 = vmatprep.subr.mxu0 0.0
    %186 = vmatpush1.msra.mxu0 0.0
    %187 = vmatprep.subr.mxu0 0.0
    %188 = vmatpush1.msra.mxu0 0.0
    %189 = vmatprep.subr.mxu0 0.0
    %190 = vmatpush1.msra.mxu0 0.0
    %191 = vmatprep.subr.mxu0 0.0
    %192 = vmatpush1.msra.mxu0 0.0
    %193 = vmatprep.subr.mxu0 0.0
    %194 = vmatpush1.msra.mxu0 0.0
    %195 = vmatprep.subr.mxu0 0.0
    %196 = vmatpush1.msra.mxu0 0.0
    %197 = vmatprep.subr.mxu0 0.0
    %198 = vmatpush1.msra.mxu0 0.0
    %199 = vmatprep.mubr.f32.mxu0 0.0
    %200 = vmatmul.mubr.f32.gmra.mrb[0].mxu0 %v56
    %v201 = vpop.f32.mrb[0].mxu0
    %v202 = vadd.f32 %v134, %v201
    %v203 = vpop.f32.mrb[0].mxu0
    %204 = vdwg.mxu0
    %v205 = vand.u32 2147483647, %v202
    %vm206 = vcmp.le.f32.partialorder %v205, 0.7853982
    %vm207 = vcmp.lt.s32.totalorder %v202, 0
    %v208 = vand.u32 %v202, 2139095040
    %v209 = vshrl.u32 %v208, 23
    %v210 = vsub.s32 %v209, 127
    %v211 = vand.u32 2147483647, %v202
    %v212 = vand.u32 %v211, 8388607
    %v213 = vor.u32 %v212, 8388608
    %v214 = vsub.s32 0, %v213
    %v215 = vadd.s32 %v210, 1
    %vm216 = vcmp.gt.s32.totalorder %v215, 0
    %v217 = vsel %vm216, %v215, 0
    %v218 = vshrl.u32 %v217, 5
    %v219 = vand.u32 %v217, 31
    %v220 = vsub.s32 32, %v219
    %v221 = vshrl.u32 683565275, %v220
    %v222 = vshll.u32 683565275, %v219
    %v223 = vshrl.u32 2475754826, %v220
    %v224 = vor.u32 %v222, %v223
    %v225 = vshll.u32 2475754826, %v219
    %v226 = vshrl.u32 2131351028, %v220
    %v227 = vor.u32 %v225, %v226
    %v228 = vshll.u32 2131351028, %v219
    %v229 = vshrl.u32 2102212464, %v220
    %v230 = vor.u32 %v228, %v229
    %v231 = vshll.u32 2102212464, %v219
    %v232 = vshrl.u32 920167782, %v220
    %v233 = vor.u32 %v231, %v232
    %v234 = vshll.u32 920167782, %v219
    %v235 = vshrl.u32 1326507024, %v220
    %v236 = vor.u32 %v234, %v235
    %vm237 = vcmp.lt.s32.totalorder %v218, 1
    %vm238 = vcmp.lt.s32.totalorder %v218, 2
    %vm239 = vcmp.lt.s32.totalorder %v218, 3
    %vm240 = vcmp.lt.s32.totalorder %v218, 4
    %v241 = vsel %vm237, %v221, %v224
    %v242 = vsel %vm240, %v230, 2102212464
    %v243 = vsel %vm239, %v227, %v242
    %v244 = vsel %vm238, %v241, %v243
    %v245 = vsel %vm237, %v224, %v227
    %v246 = vsel %vm240, %v233, 920167782
    %v247 = vsel %vm239, %v230, %v246
    %v248 = vsel %vm238, %v245, %v247
    %v249 = vsel %vm237, %v227, %v230
    %v250 = vsel %vm240, %v236, 1326507024
    %v251 = vsel %vm239, %v233, %v250
    %v252 = vsel %vm238, %v249, %v251
    %v253 = vshll.u32 %v213, 8
    %v254 = vmul.u32.u64.compose %v253, %v252
    %v255 = vextract.low.u32 %v254
    %v256 = vextract.high.u32 %v254
    %v257 = vmul.u32.u64.compose %v253, %v248
    %v258 = vextract.low.u32 %v257
    %v259 = vextract.high.u32 %v257
    %v260 = vmul.u32 %v253, %v244
    %v261 = vadd.s32 %v256, %v258
    %vm262 = vc.u32 %v256, %v258
    %v263 = vadd.s32 %v259, 1
    %v264 = vsel %vm262, %v263, %v259
    %v265 = vadd.s32 %v260, %v264
    %v266 = vadd.s32 %v265, 536870912
    %v267 = vshrl.u32 %v266, 30
    %v268 = vshll.u32 %v267, 30
    %v269 = vsub.s32 %v265, %v268
    %vm270 = vcmp.lt.s32.totalorder %v269, 0
    %v271 = vsub.s32 0, %v269
    %v272 = vsel %vm270, %v271, %v269
    %v273 = vclz %v272
    %v274 = vsub.s32 %v273, 2
    %vm275 = vcmp.gt.s32.totalorder 0, %v274
    %v276 = vsel %vm275, 0, %v274
    %v277 = vsub.s32 32, %v276
    %v278 = vshll.u32 %v269, %v276
    %v279 = vshrl.u32 %v261, %v277
    %v280 = vor.u32 %v278, %v279
    %v281 = vsub.s32 4294967266, %v276
    %v282 = vadd.s32 %v281, 127
    %v283 = vshll.u32 %v282, 23
    %v284 = vor.u32 4788187, %v283
    %v285 = vand.u32 2147483647, %v284
    %v287 = vcvt.s32.f32 %v280
    %v288 = vmul.f32 %v287, %v285
    %v289 = vxor.u32 %v288, 2147483648
    %v290 = vsel %vm207, %v289, %v288
    %v291 = vsub.s32 4, %v267
    %v292 = vsel %vm207, %v291, %v267
    %v293 = vsel %vm206, %v202, %v290
    %v294 = vsel %vm206, 0, %v292
    %v295 = vcosq.f32.pop %v293
    %v296 = vsinq.f32.pop %v293
    %vm297 = vweird.f32 %v202
    %v298 = vadd.s32 %v294, 3
    %v299 = vand.u32 %v298, 3
    %vm300 = vcmp.lt.s32.totalorder %v299, 2
    %vm301 = vcmp.eq.s32.totalorder %v299, 0
    %v302 = vxor.u32 %v296, 2147483648
    %v303 = vsel %vm301, %v295, %v302
    %vm304 = vcmp.eq.s32.totalorder %v299, 2
    %v305 = vxor.u32 %v295, 2147483648
    %v306 = vsel %vm304, %v305, %v296
    %v307 = vsel %vm300, %v303, %v306
    %v308 = vsel %vm297, nan, %v307
    %v309 = vlaneseq
    %v310 = vshrl.u32 %v309, 7
    %v311 = vsub.s32 2, %v310
    %v312 = vrot.slane %v49, %v311
    %vm313 = vcmask 130048
    %v315 = vsel %vm313, %v308, 0
    %317 = vmatprep.subr.mxu0 0.0
    %318 = vmatpush1.msra.mxu0 %v47
    %319 = vmatprep.subr.mxu0 0.0
    %320 = vmatpush1.msra.mxu0 %v48
    %321 = vmatprep.subr.mxu0 0.0
    %322 = vmatpush1.msra.mxu0 0.0
    %323 = vmatprep.subr.mxu0 0.0
    %324 = vmatpush1.msra.mxu0 0.0
    %325 = vmatprep.subr.mxu0 0.0
    %326 = vmatpush1.msra.mxu0 0.0
    %327 = vmatprep.subr.mxu0 0.0
    %328 = vmatpush1.msra.mxu0 0.0
    %329 = vmatprep.subr.mxu0 0.0
    %330 = vmatpush1.msra.mxu0 0.0
    %331 = vmatprep.subr.mxu0 0.0
    %332 = vmatpush1.msra.mxu0 0.0
    %333 = vmatprep.subr.mxu0 0.0
    %334 = vmatpush1.msra.mxu0 0.0
    %335 = vmatprep.subr.mxu0 0.0
    %336 = vmatpush1.msra.mxu0 0.0
    %337 = vmatprep.subr.mxu0 0.0
    %338 = vmatpush1.msra.mxu0 0.0
    %339 = vmatprep.subr.mxu0 0.0
    %340 = vmatpush1.msra.mxu0 0.0
    %341 = vmatprep.subr.mxu0 0.0
    %342 = vmatpush1.msra.mxu0 0.0
    %343 = vmatprep.subr.mxu0 0.0
    %344 = vmatpush1.msra.mxu0 0.0
    %345 = vmatprep.subr.mxu0 0.0
    %346 = vmatpush1.msra.mxu0 0.0
    %347 = vmatprep.subr.mxu0 0.0
    %348 = vmatpush1.msra.mxu0 0.0
    %349 = vmatprep.subr.mxu0 0.0
    %350 = vmatpush1.msra.mxu0 0.0
    %351 = vmatprep.subr.mxu0 0.0
    %352 = vmatpush1.msra.mxu0 0.0
    %353 = vmatprep.subr.mxu0 0.0
    %354 = vmatpush1.msra.mxu0 0.0
    %355 = vmatprep.subr.mxu0 0.0
    %356 = vmatpush1.msra.mxu0 0.0
    %357 = vmatprep.subr.mxu0 0.0
    %358 = vmatpush1.msra.mxu0 0.0
    %359 = vmatprep.subr.mxu0 0.0
    %360 = vmatpush1.msra.mxu0 0.0
    %361 = vmatprep.subr.mxu0 0.0
    %362 = vmatpush1.msra.mxu0 0.0
    %363 = vmatprep.subr.mxu0 0.0
    %364 = vmatpush1.msra.mxu0 0.0
    %365 = vmatprep.subr.mxu0 0.0
    %366 = vmatpush1.msra.mxu0 0.0
    %367 = vmatprep.subr.mxu0 0.0
    %368 = vmatpush1.msra.mxu0 0.0
    %369 = vmatprep.subr.mxu0 0.0
    %370 = vmatpush1.msra.mxu0 0.0
    %371 = vmatprep.subr.mxu0 0.0
    %372 = vmatpush1.msra.mxu0 0.0
    %373 = vmatprep.subr.mxu0 0.0
    %374 = vmatpush1.msra.mxu0 0.0
    %375 = vmatprep.subr.mxu0 0.0
    %376 = vmatpush1.msra.mxu0 0.0
    %377 = vmatprep.subr.mxu0 0.0
    %378 = vmatpush1.msra.mxu0 0.0
    %379 = vmatprep.subr.mxu0 0.0
    %380 = vmatpush1.msra.mxu0 0.0
    %381 = vmatprep.mubr.f32.mxu0 0.0
    %382 = vmatmul.mubr.f32.gmra.mrb[0].mxu0 %v315
    %v383 = vpop.f32.mrb[0].mxu0
    %v384 = vadd.f32 %v312, %v383
    %v385 = vpop.f32.mrb[0].mxu0
    %386 = vdwg.mxu0
    %vm387 = vcmp.gt.f32.partialorder %v384, 0.0
    %v388 = vmul.f32 %v384, 0.01
    %v389 = vsel %vm387, %v384, %v388
    %v390 = vld [vmem:[%s3] sm:$0xff]
    %v391 = vld [vmem:[%s3 + $0x8] sm:$0xff]
    %v392 = vld [vmem:[%s3 + $0x10] sm:$0xff]
    %v393 = vld [vmem:[%s3 + $0x18] sm:$0xff]
    %v394 = vld [vmem:[%s5] sm:$0x1]
    %v395 = vld [vmem:[%s5 + $0x1] sm:$0x1]
    %v397 = vsel %vm313, %v389, 0
    %399 = vmatprep.subr.mxu0 0.0
    %400 = vmatpush1.msra.mxu0 %v392
    %401 = vmatprep.subr.mxu0 0.0
    %402 = vmatpush1.msra.mxu0 %v393
    %403 = vmatprep.subr.mxu0 0.0
    %404 = vmatpush1.msra.mxu0 0.0
    %405 = vmatprep.subr.mxu0 0.0
    %406 = vmatpush1.msra.mxu0 0.0
    %407 = vmatprep.subr.mxu0 0.0
    %408 = vmatpush1.msra.mxu0 0.0
    %409 = vmatprep.subr.mxu0 0.0
    %410 = vmatpush1.msra.mxu0 0.0
    %411 = vmatprep.subr.mxu0 0.0
    %412 = vmatpush1.msra.mxu0 0.0
    %413 = vmatprep.subr.mxu0 0.0
    %414 = vmatpush1.msra.mxu0 0.0
    %415 = vmatprep.subr.mxu0 0.0
    %416 = vmatpush1.msra.mxu0 0.0
    %417 = vmatprep.subr.mxu0 0.0
    %418 = vmatpush1.msra.mxu0 0.0
    %419 = vmatprep.subr.mxu0 0.0
    %420 = vmatpush1.msra.mxu0 0.0
    %421 = vmatprep.subr.mxu0 0.0
    %422 = vmatpush1.msra.mxu0 0.0
    %423 = vmatprep.subr.mxu0 0.0
    %424 = vmatpush1.msra.mxu0 0.0
    %425 = vmatprep.subr.mxu0 0.0
    %426 = vmatpush1.msra.mxu0 0.0
    %427 = vmatprep.subr.mxu0 0.0
    %428 = vmatpush1.msra.mxu0 0.0
    %429 = vmatprep.subr.mxu0 0.0
    %430 = vmatpush1.msra.mxu0 0.0
    %431 = vmatprep.subr.mxu0 0.0
    %432 = vmatpush1.msra.mxu0 0.0
    %433 = vmatprep.subr.mxu0 0.0
    %434 = vmatpush1.msra.mxu0 0.0
    %435 = vmatprep.subr.mxu0 0.0
    %436 = vmatpush1.msra.mxu0 0.0
    %437 = vmatprep.subr.mxu0 0.0
    %438 = vmatpush1.msra.mxu0 0.0
    %439 = vmatprep.subr.mxu0 0.0
    %440 = vmatpush1.msra.mxu0 0.0
    %441 = vmatprep.subr.mxu0 0.0
    %442 = vmatpush1.msra.mxu0 0.0
    %443 = vmatprep.subr.mxu0 0.0
    %444 = vmatpush1.msra.mxu0 0.0
    %445 = vmatprep.subr.mxu0 0.0
    %446 = vmatpush1.msra.mxu0 0.0
    %447 = vmatprep.subr.mxu0 0.0
    %448 = vmatpush1.msra.mxu0 0.0
    %449 = vmatprep.subr.mxu0 0.0
    %450 = vmatpush1.msra.mxu0 0.0
    %451 = vmatprep.subr.mxu0 0.0
    %452 = vmatpush1.msra.mxu0 0.0
    %453 = vmatprep.subr.mxu0 0.0
    %454 = vmatpush1.msra.mxu0 0.0
    %455 = vmatprep.subr.mxu0 0.0
    %456 = vmatpush1.msra.mxu0 0.0
    %457 = vmatprep.subr.mxu0 0.0
    %458 = vmatpush1.msra.mxu0 0.0
    %459 = vmatprep.subr.mxu0 0.0
    %460 = vmatpush1.msra.mxu0 0.0
    %461 = vmatprep.subr.mxu0 0.0
    %462 = vmatpush1.msra.mxu0 0.0
    %463 = vmatprep.mubr.f32.mxu0 0.0
    %464 = vmatmul.mubr.f32.gmra.mrb[0].mxu0 %v397
    %v465 = vpop.f32.mrb[0].mxu0
    %v466 = vadd.f32 0.0, %v465
    %v467 = vpop.f32.mrb[0].mxu0
    %468 = vdwg.mxu0
    %v470 = vsel %vm313, %v130, 0
    %472 = vmatprep.subr.mxu0 0.0
    %473 = vmatpush1.msra.mxu0 %v390
    %474 = vmatprep.subr.mxu0 0.0
    %475 = vmatpush1.msra.mxu0 %v391
    %476 = vmatprep.subr.mxu0 0.0
    %477 = vmatpush1.msra.mxu0 0.0
    %478 = vmatprep.subr.mxu0 0.0
    %479 = vmatpush1.msra.mxu0 0.0
    %480 = vmatprep.subr.mxu0 0.0
    %481 = vmatpush1.msra.mxu0 0.0
    %482 = vmatprep.subr.mxu0 0.0
    %483 = vmatpush1.msra.mxu0 0.0
    %484 = vmatprep.subr.mxu0 0.0
    %485 = vmatpush1.msra.mxu0 0.0
    %486 = vmatprep.subr.mxu0 0.0
    %487 = vmatpush1.msra.mxu0 0.0
    %488 = vmatprep.subr.mxu0 0.0
    %489 = vmatpush1.msra.mxu0 0.0
    %490 = vmatprep.subr.mxu0 0.0
    %491 = vmatpush1.msra.mxu0 0.0
    %492 = vmatprep.subr.mxu0 0.0
    %493 = vmatpush1.msra.mxu0 0.0
    %494 = vmatprep.subr.mxu0 0.0
    %495 = vmatpush1.msra.mxu0 0.0
    %496 = vmatprep.subr.mxu0 0.0
    %497 = vmatpush1.msra.mxu0 0.0
    %498 = vmatprep.subr.mxu0 0.0
    %499 = vmatpush1.msra.mxu0 0.0
    %500 = vmatprep.subr.mxu0 0.0
    %501 = vmatpush1.msra.mxu0 0.0
    %502 = vmatprep.subr.mxu0 0.0
    %503 = vmatpush1.msra.mxu0 0.0
    %504 = vmatprep.subr.mxu0 0.0
    %505 = vmatpush1.msra.mxu0 0.0
    %506 = vmatprep.subr.mxu0 0.0
    %507 = vmatpush1.msra.mxu0 0.0
    %508 = vmatprep.subr.mxu0 0.0
    %509 = vmatpush1.msra.mxu0 0.0
    %510 = vmatprep.subr.mxu0 0.0
    %511 = vmatpush1.msra.mxu0 0.0
    %512 = vmatprep.subr.mxu0 0.0
    %513 = vmatpush1.msra.mxu0 0.0
    %514 = vmatprep.subr.mxu0 0.0
    %515 = vmatpush1.msra.mxu0 0.0
    %516 = vmatprep.subr.mxu0 0.0
    %517 = vmatpush1.msra.mxu0 0.0
    %518 = vmatprep.subr.mxu0 0.0
    %519 = vmatpush1.msra.mxu0 0.0
    %520 = vmatprep.subr.mxu0 0.0
    %521 = vmatpush1.msra.mxu0 0.0
    %522 = vmatprep.subr.mxu0 0.0
    %523 = vmatpush1.msra.mxu0 0.0
    %524 = vmatprep.subr.mxu0 0.0
    %525 = vmatpush1.msra.mxu0 0.0
    %526 = vmatprep.subr.mxu0 0.0
    %527 = vmatpush1.msra.mxu0 0.0
    %528 = vmatprep.subr.mxu0 0.0
    %529 = vmatpush1.msra.mxu0 0.0
    %530 = vmatprep.subr.mxu0 0.0
    %531 = vmatpush1.msra.mxu0 0.0
    %532 = vmatprep.subr.mxu0 0.0
    %533 = vmatpush1.msra.mxu0 0.0
    %534 = vmatprep.subr.mxu0 0.0
    %535 = vmatpush1.msra.mxu0 0.0
    %536 = vmatprep.mubr.f32.mxu0 0.0
    %537 = vmatmul.mubr.f32.gmra.mrb[0].mxu0 %v470
    %v538 = vpop.f32.mrb[0].mxu0
    %v539 = vadd.f32 %v466, %v538
    %v540 = vpop.f32.mrb[0].mxu0
    %541 = vdwg.mxu0
    %v542 = vlaneseq
    %v543 = vshrl.u32 %v542, 7
    %v544 = vsub.s32 0, %v543
    %v545 = vrot.slane %v394, %v544
    %v546 = vadd.f32 %v539, %v545
    %vm547 = vcmp.gt.f32.partialorder %v546, 0.0
    %v548 = vmul.f32 %v546, 0.01
    %v549 = vsel %vm547, %v546, %v548
    %v550 = vld [vmem:[#allocation2] sm:$0xff]
    %v551 = vld [vmem:[#allocation2 + $0x8] sm:$0xff]
    %v552 = vld [vmem:[#allocation2 + $0x10] sm:$0xff]
    %v553 = vld [vmem:[#allocation2 + $0x18] sm:$0xff]
    %v554 = vld [vmem:[#allocation2 + $0x20] sm:$0xff]
    %v555 = vld [vmem:[#allocation2 + $0x28] sm:$0xff]
    %v556 = vld [vmem:[#allocation2 + $0x30] sm:$0xff]
    %v557 = vld [vmem:[#allocation2 + $0x38] sm:$0xff]
    %v558 = vld [vmem:[#allocation2 + $0x40] sm:$0xff]
    %v559 = vld [vmem:[#allocation2 + $0x48] sm:$0xff]
    %v560 = vld [vmem:[#allocation2 + $0x50] sm:$0xff]
    %v561 = vld [vmem:[#allocation2 + $0x58] sm:$0xff]
    %v562 = vld [vmem:[#allocation2 + $0x60] sm:$0xff]
    %v563 = vld [vmem:[#allocation2 + $0x68] sm:$0xff]
    %v564 = vld [vmem:[#allocation2 + $0x70] sm:$0xff]
    %v565 = vld [vmem:[#allocation2 + $0x78] sm:$0xff]
    %v566 = vlaneseq
    %v567 = vshrl.u32 %v566, 7
    %v568 = vsub.s32 0, %v567
    %v569 = vrot.slane %v395, %v568
    %570 = vmatprep.subr.mxu0 0.0
    %571 = vmatpush1.msra.mxu0 %v550
    %572 = vmatprep.subr.mxu0 0.0
    %573 = vmatpush1.msra.mxu0 %v551
    %574 = vmatprep.subr.mxu0 0.0
    %575 = vmatpush1.msra.mxu0 %v552
    %576 = vmatprep.subr.mxu0 0.0
    %577 = vmatpush1.msra.mxu0 %v553
    %578 = vmatprep.subr.mxu0 0.0
    %579 = vmatpush1.msra.mxu0 %v554
    %580 = vmatprep.subr.mxu0 0.0
    %581 = vmatpush1.msra.mxu0 %v555
    %582 = vmatprep.subr.mxu0 0.0
    %583 = vmatpush1.msra.mxu0 %v556
    %584 = vmatprep.subr.mxu0 0.0
    %585 = vmatpush1.msra.mxu0 %v557
    %586 = vmatprep.subr.mxu0 0.0
    %587 = vmatpush1.msra.mxu0 %v558
    %588 = vmatprep.subr.mxu0 0.0
    %589 = vmatpush1.msra.mxu0 %v559
    %590 = vmatprep.subr.mxu0 0.0
    %591 = vmatpush1.msra.mxu0 %v560
    %592 = vmatprep.subr.mxu0 0.0
    %593 = vmatpush1.msra.mxu0 %v561
    %594 = vmatprep.subr.mxu0 0.0
    %595 = vmatpush1.msra.mxu0 %v562
    %596 = vmatprep.subr.mxu0 0.0
    %597 = vmatpush1.msra.mxu0 %v563
    %598 = vmatprep.subr.mxu0 0.0
    %599 = vmatpush1.msra.mxu0 %v564
    %600 = vmatprep.subr.mxu0 0.0
    %601 = vmatpush1.msra.mxu0 %v565
    %602 = vmatprep.subr.mxu0 0.0
    %603 = vmatpush1.msra.mxu0 0.0
    %604 = vmatprep.subr.mxu0 0.0
    %605 = vmatpush1.msra.mxu0 0.0
    %606 = vmatprep.subr.mxu0 0.0
    %607 = vmatpush1.msra.mxu0 0.0
    %608 = vmatprep.subr.mxu0 0.0
    %609 = vmatpush1.msra.mxu0 0.0
    %610 = vmatprep.subr.mxu0 0.0
    %611 = vmatpush1.msra.mxu0 0.0
    %612 = vmatprep.subr.mxu0 0.0
    %613 = vmatpush1.msra.mxu0 0.0
    %614 = vmatprep.subr.mxu0 0.0
    %615 = vmatpush1.msra.mxu0 0.0
    %616 = vmatprep.subr.mxu0 0.0
    %617 = vmatpush1.msra.mxu0 0.0
    %618 = vmatprep.subr.mxu0 0.0
    %619 = vmatpush1.msra.mxu0 0.0
    %620 = vmatprep.subr.mxu0 0.0
    %621 = vmatpush1.msra.mxu0 0.0
    %622 = vmatprep.subr.mxu0 0.0
    %623 = vmatpush1.msra.mxu0 0.0
    %624 = vmatprep.subr.mxu0 0.0
    %625 = vmatpush1.msra.mxu0 0.0
    %626 = vmatprep.subr.mxu0 0.0
    %627 = vmatpush1.msra.mxu0 0.0
    %628 = vmatprep.subr.mxu0 0.0
    %629 = vmatpush1.msra.mxu0 0.0
    %630 = vmatprep.subr.mxu0 0.0
    %631 = vmatpush1.msra.mxu0 0.0
    %632 = vmatprep.subr.mxu0 0.0
    %633 = vmatpush1.msra.mxu0 0.0
    %634 = vmatprep.mubr.f32.mxu0 0.0
    %635 = vmatmul.mubr.f32.gmra.mrb[0].mxu0 %v549
    %v636 = vpop.f32.mrb[0].mxu0
    %v637 = vadd.f32 %v569, %v636
    %v638 = vpop.f32.mrb[0].mxu0
    %639 = vdwg.mxu0
    %vm640 = vcmp.gt.f32.partialorder %v637, 0.0
    %v641 = vmul.f32 %v637, 0.01
    %v642 = vsel %vm640, %v637, %v641
    %v643 = vld [vmem:[%s6] sm:$0xf]
    %v644 = vld [vmem:[%s7] sm:$0xf]
    %646 = vset.pattern.permute.xlu0 0
    %647 = vperm.xlu0 %646, %v644
    %v648 = vpop.permute.xlu0 %647
    %650 = vmatprep.subr.mxu0 0.0
    %651 = vmatpush1.xpose.msra.mxu0 %v642
    %652 = vmatprep.subr.mxu0 0.0
    %653 = vmatpush1.xpose.msra.mxu0 0.0
    %654 = vmatprep.subr.mxu0 0.0
    %655 = vmatpush1.xpose.msra.mxu0 0.0
    %656 = vmatprep.subr.mxu0 0.0
    %657 = vmatpush1.xpose.msra.mxu0 0.0
    %658 = vmatprep.subr.mxu0 0.0
    %659 = vmatpush1.xpose.msra.mxu0 0.0
    %660 = vmatprep.subr.mxu0 0.0
    %661 = vmatpush1.xpose.msra.mxu0 0.0
    %662 = vmatprep.subr.mxu0 0.0
    %663 = vmatpush1.xpose.msra.mxu0 0.0
    %664 = vmatprep.subr.mxu0 0.0
    %665 = vmatpush1.xpose.msra.mxu0 0.0
    %666 = vmatprep.subr.mxu0 0.0
    %667 = vmatpush1.xpose.msra.mxu0 0.0
    %668 = vmatprep.subr.mxu0 0.0
    %669 = vmatpush1.xpose.msra.mxu0 0.0
    %670 = vmatprep.subr.mxu0 0.0
    %671 = vmatpush1.xpose.msra.mxu0 0.0
    %672 = vmatprep.subr.mxu0 0.0
    %673 = vmatpush1.xpose.msra.mxu0 0.0
    %674 = vmatprep.subr.mxu0 0.0
    %675 = vmatpush1.xpose.msra.mxu0 0.0
    %676 = vmatprep.subr.mxu0 0.0
    %677 = vmatpush1.xpose.msra.mxu0 0.0
    %678 = vmatprep.subr.mxu0 0.0
    %679 = vmatpush1.xpose.msra.mxu0 0.0
    %680 = vmatprep.subr.mxu0 0.0
    %681 = vmatpush1.xpose.msra.mxu0 0.0
    %682 = vmatprep.subr.mxu0 0.0
    %683 = vmatpush1.xpose.msra.mxu0 0.0
    %684 = vmatprep.subr.mxu0 0.0
    %685 = vmatpush1.xpose.msra.mxu0 0.0
    %686 = vmatprep.subr.mxu0 0.0
    %687 = vmatpush1.xpose.msra.mxu0 0.0
    %688 = vmatprep.subr.mxu0 0.0
    %689 = vmatpush1.xpose.msra.mxu0 0.0
    %690 = vmatprep.subr.mxu0 0.0
    %691 = vmatpush1.xpose.msra.mxu0 0.0
    %692 = vmatprep.subr.mxu0 0.0
    %693 = vmatpush1.xpose.msra.mxu0 0.0
    %694 = vmatprep.subr.mxu0 0.0
    %695 = vmatpush1.xpose.msra.mxu0 0.0
    %696 = vmatprep.subr.mxu0 0.0
    %697 = vmatpush1.xpose.msra.mxu0 0.0
    %698 = vmatprep.subr.mxu0 0.0
    %699 = vmatpush1.xpose.msra.mxu0 0.0
    %700 = vmatprep.subr.mxu0 0.0
    %701 = vmatpush1.xpose.msra.mxu0 0.0
    %702 = vmatprep.subr.mxu0 0.0
    %703 = vmatpush1.xpose.msra.mxu0 0.0
    %704 = vmatprep.subr.mxu0 0.0
    %705 = vmatpush1.xpose.msra.mxu0 0.0
    %706 = vmatprep.subr.mxu0 0.0
    %707 = vmatpush1.xpose.msra.mxu0 0.0
    %708 = vmatprep.subr.mxu0 0.0
    %709 = vmatpush1.xpose.msra.mxu0 0.0
    %710 = vmatprep.subr.mxu0 0.0
    %711 = vmatpush1.xpose.msra.mxu0 0.0
    %712 = vmatprep.subr.mxu0 0.0
    %713 = vmatpush1.xpose.msra.mxu0 0.0
    %714 = vmatprep.mubr.f32.mxu0 0.0
    %715 = vmatmul.mubr.f32.gmra.mrb[0].mxu0 %v643
    %v716 = vpop.f32.mrb[0].mxu0
    %v717 = vadd.f32 %v648, %v716
    %v718 = vpop.f32.mrb[0].mxu0
    %719 = vdwg.mxu0
    %vm720 = vcmask 60416
    %721 = vst.msk [vmem:[#allocation5] sm:$0xf] %vm720, %v717
    // Predicated region
    $region38: #{tpu_custom_call.1} parent=1 // pred_check
      _
    $region39: #{tpu_custom_call.1} parent=1 // pred_check_branch
      %723 = sbr.rel (0) target = $region41
    $region40: #{tpu_custom_call.1} parent=1 // pred_region
      %s725 = ssub.s32 64, 64
      %726 = vsyncadd [#allocation4], %s725
      %s728 = sshll.u32 [#allocation5], 4
      %s729 = int_to_ptr.vmem [resolvable:$true] %s728
      %731 = dma.vmem_to_hbm [thread:$0]  %s729, 64, %s8, [#allocation4]
    $region41: #{tpu_custom_call.1} parent=1 // pred_fallthru
      _
    // Predicated region
    $region42: #{tpu_custom_call.1} parent=1 // pred_check
      _
    $region43: #{tpu_custom_call.1} parent=1 // pred_check_branch
      %733 = sbr.rel (0) target = $region45
    $region44: #{tpu_custom_call.1} parent=1 // pred_region
      %734 = dma.done [#allocation4], 64
    $region45: #{tpu_custom_call.1} parent=1 // pred_fallthru
      _
    %735 = vsyncpa [#allocation3], 1
    %736 = vsyncpa [#allocation4], 1

</llo_original>
